<compile_context>
chip_gen: v7x
topology: tpu7x:2x2x1
jax: 0.10.0
libtpu: 0.0.40
codegen_flags: <defaults>
</compile_context>

<pallas_src>
import functools

import jax
import jax.numpy as jnp
from jax.experimental import pallas as pl
from jax.experimental.pallas import tpu as pltpu


def _round_up(x, m):
    return ((x + m - 1) // m) * m


def _choose_tile_n(n, c, itemsize):
    # Budget counts the double-buffered input tile AND ~5 f32 (T, C_lanes)
    # intermediates (cast/shifted/exp/mask/where temps) so the choice is safe
    # on v7x's 64 MiB VMEM as well as v5e/v6e.
    budget_bytes = 20 * 1024 * 1024
    c_lanes = _round_up(max(c, 1), 128)                  # lane padding of C
    per_row = c_lanes * (2 * max(int(itemsize), 1) + 20)
    rows = budget_bytes // per_row
    rows = max(8, min(8192, (rows // 8) * 8))
    return int(min(rows, _round_up(max(n, 1), 8)))


def _vmem_limit_bytes(tile_n, c, itemsize):
    c_lanes = _round_up(max(c, 1), 128)
    est = tile_n * c_lanes * (2 * max(int(itemsize), 1) + 20)
    est += tile_n * 2 * 4                                # targets (x2 buffers)
    est += 2 * 8 * 128 * 4 + c_lanes * 4                 # out blocks + alpha
    return int(max(32 << 20, min(64 << 20, (est * 3) // 2)))


def _focal_tile(logits, tgt, alpha_vec, alpha_scalar, gamma):
    """Per-row focal loss for one tile.

    logits: (T, C) f32, tgt: (T, 1) i32, alpha_vec: (1, C) f32 or None.
    Returns (T, 1) f32.
    """
    m = jnp.max(logits, axis=-1, keepdims=True)
    shifted = logits - m
    e = jnp.exp(shifted)                                  # single (T, C) exp
    sumexp = jnp.sum(e, axis=-1, keepdims=True)           # (T, 1)

    cls = jax.lax.broadcasted_iota(jnp.int32, (1, logits.shape[-1]), 1)
    mask = (cls == tgt)                                   # (T, C) via broadcast

    # Fused "gather" of the target logit (single match per valid row).
    shifted_t = jnp.sum(jnp.where(mask, shifted, 0.0), axis=-1, keepdims=True)

    ce = jnp.log(sumexp) - shifted_t                      # cross entropy (T, 1)
    pt = jnp.exp(-ce)                                     # EUP exp on T elems
    one_minus_pt = jnp.maximum(1.0 - pt, 0.0)             # clamp rounding

    g = float(gamma)
    if g == round(g) and 0.0 <= g <= 8.0:
        gi = int(round(g))
        if gi == 0:
            w = jnp.ones_like(one_minus_pt)
        else:
            w = one_minus_pt
            for _ in range(gi - 1):                       # gamma=2 -> x*x
                w = w * one_minus_pt
    else:
        w = one_minus_pt ** g

    focal = w * ce
    if alpha_vec is not None:
        alpha_t = jnp.sum(jnp.where(mask, alpha_vec, 0.0), axis=-1,
                          keepdims=True)
        focal = alpha_t * focal
    elif alpha_scalar is not None:
        focal = float(alpha_scalar) * focal
    return focal


def _focal_partial_kernel(*refs, gamma, n_total, tile_n, alpha_scalar,
                          has_alpha_vec):
    """mean/sum path: each grid step emits one (1, 8, 128) partial-sum block."""
    if has_alpha_vec:
        logits_ref, targets_ref, alpha_ref, out_ref = refs
        alpha_vec = alpha_ref[...].astype(jnp.float32)
    else:
        logits_ref, targets_ref, out_ref = refs
        alpha_vec = None

    pid = pl.program_id(0)
    focal = _focal_tile(logits_ref[...].astype(jnp.float32),
                        targets_ref[...], alpha_vec, alpha_scalar,
                        gamma)                            # (tile_n, 1)

    # Mask rows past the true batch size (ragged last tile, no input padding).
    row = pid * tile_n + jax.lax.broadcasted_iota(jnp.int32, (tile_n, 1), 0)
    focal = jnp.where(row < n_total, focal, 0.0)

    partial = jnp.sum(focal)                              # per-tile scalar
    out_ref[...] = jnp.zeros((1, 8, 128), jnp.float32) + partial


def _focal_none_kernel(*refs, gamma, alpha_scalar, has_alpha_vec):
    if has_alpha_vec:
        logits_ref, targets_ref, alpha_ref, out_ref = refs
        alpha_vec = alpha_ref[...].astype(jnp.float32)
    else:
        logits_ref, targets_ref, out_ref = refs
        alpha_vec = None
    out_ref[...] = _focal_tile(logits_ref[...].astype(jnp.float32),
                               targets_ref[...], alpha_vec, alpha_scalar,
                               gamma)


def focal_loss(logits, targets, alpha=None, gamma=2.0, reduction="mean",
               tile_n=None):
    """Pallas TPU focal loss.

    logits:  (N, C) float array (f32 or bf16; DMA'd in its own dtype)
    targets: (N,)   int array of class indices
    alpha:   None, python scalar, or (C,) array of per-class weights
    """
    n, c = logits.shape
    targets_2d = targets.astype(jnp.int32).reshape(n, 1)

    alpha_scalar = None
    alpha_vec = None
    if isinstance(alpha, (float, int)):
        alpha_scalar = float(alpha)
    elif alpha is not None:
        alpha_vec = jnp.asarray(alpha, jnp.float32).reshape(1, c)
    has_alpha_vec = alpha_vec is not None

    itemsize = jnp.dtype(logits.dtype).itemsize
    if tile_n is None:
        tile_n = _choose_tile_n(n, c, itemsize)
    tile_n = max(8, _round_up(min(int(tile_n), _round_up(n, 8)), 8))

    num_tiles = -(-n // tile_n)                           # ceil div, no padding
    grid = (num_tiles,)
    vmem_limit = _vmem_limit_bytes(tile_n, c, itemsize)

    in_specs = [
        pl.BlockSpec((tile_n, c), lambda i: (i, 0)),      # logits tile
        pl.BlockSpec((tile_n, 1), lambda i: (i, 0)),      # targets tile
    ]
    operands = [logits, targets_2d]
    if has_alpha_vec:
        in_specs.append(pl.BlockSpec((1, c), lambda i: (0, 0)))  # resident
        operands.append(alpha_vec)

    if reduction in ("mean", "sum"):
        kernel = functools.partial(_focal_partial_kernel, gamma=float(gamma),
                                   n_total=n, tile_n=tile_n,
                                   alpha_scalar=alpha_scalar,
                                   has_alpha_vec=has_alpha_vec)
        partials = pl.pallas_call(
            kernel,
            out_shape=jax.ShapeDtypeStruct((num_tiles, 8, 128), jnp.float32),
            grid_spec=pltpu.PrefetchScalarGridSpec(
                num_scalar_prefetch=0,
                grid=grid,
                in_specs=in_specs,
                out_specs=pl.BlockSpec((1, 8, 128), lambda i: (i, 0, 0))),
            compiler_params=pltpu.CompilerParams(
                dimension_semantics=("parallel",),
                vmem_limit_bytes=vmem_limit),
        )(*operands)
        total = jnp.sum(partials[:, 0, 0])                # tiny final reduce
        if reduction == "mean":
            total = total / float(n)
        return total

    # reduction == 'none'
    kernel = functools.partial(_focal_none_kernel, gamma=float(gamma),
                               alpha_scalar=alpha_scalar,
                               has_alpha_vec=has_alpha_vec)
    out = pl.pallas_call(
        kernel,
        out_shape=jax.ShapeDtypeStruct((n, 1), jnp.float32),
        grid_spec=pltpu.PrefetchScalarGridSpec(
            num_scalar_prefetch=0,
            grid=grid,
            in_specs=in_specs,
            out_specs=pl.BlockSpec((tile_n, 1), lambda i: (i, 0))),
        compiler_params=pltpu.CompilerParams(
            dimension_semantics=("parallel",),
            vmem_limit_bytes=vmem_limit),
    )(*operands)
    return out[:, 0]


def _reference_focal_loss(logits, targets, alpha=None, gamma=2.0,
                          reduction="mean"):
    """Pure-JAX reference mirroring the PyTorch module."""
    logp = jax.nn.log_softmax(logits.astype(jnp.float32), axis=-1)
    ce = -jnp.take_along_axis(logp, targets[:, None], axis=-1)[:, 0]
    pt = jnp.exp(-ce)
    focal = (1.0 - pt) ** gamma * ce
    if alpha is not None:
        if isinstance(alpha, (float, int)):
            focal = alpha * focal
        else:
            focal = jnp.asarray(alpha)[targets] * focal
    if reduction == "mean":
        return jnp.mean(focal)
    if reduction == "sum":
        return jnp.sum(focal)
    return focal


if __name__ == "__main__":
    key = jax.random.PRNGKey(0)
    k1, k2, k3, k4 = jax.random.split(key, 4)

    # --- default module config: alpha=None, gamma=2.0, reduction='mean' ---
    N, C = 8, 4                        # small classification-head shapes
    logits = jax.random.normal(k1, (N, C), jnp.float32)
    targets = jax.random.randint(k2, (N,), 0, C, jnp.int32)

    loss = focal_loss(logits, targets, alpha=None, gamma=2.0, reduction="mean")
    jax.block_until_ready(loss)
    ref = _reference_focal_loss(logits, targets, alpha=None, gamma=2.0,
                                reduction="mean")
    assert jnp.allclose(loss, ref, atol=1e-5, rtol=1e-5), (loss, ref)

    # --- per-class alpha vector + 'none' reduction path ---
    alpha_vec = jnp.array([0.25, 0.75, 1.0, 0.5], jnp.float32)
    loss_none = focal_loss(logits, targets, alpha=alpha_vec, gamma=2.0,
                           reduction="none")
    jax.block_until_ready(loss_none)
    ref_none = _reference_focal_loss(logits, targets, alpha=alpha_vec,
                                     gamma=2.0, reduction="none")
    assert jnp.allclose(loss_none, ref_none, atol=1e-5, rtol=1e-5)

    # --- multi-tile grid with ragged last tile (no padding, row masking) ---
    N2, C2 = 300, 13
    logits2 = jax.random.normal(k3, (N2, C2), jnp.float32)
    targets2 = jax.random.randint(k4, (N2,), 0, C2, jnp.int32)

    loss2 = focal_loss(logits2, targets2, alpha=0.5, gamma=2.0,
                       reduction="mean", tile_n=128)
    jax.block_until_ready(loss2)
    ref2 = _reference_focal_loss(logits2, targets2, alpha=0.5, gamma=2.0,
                                 reduction="mean")
    assert jnp.allclose(loss2, ref2, atol=1e-5, rtol=1e-5), (loss2, ref2)

    loss2s = focal_loss(logits2, targets2, gamma=2.0, reduction="sum",
                        tile_n=128)
    jax.block_until_ready(loss2s)
    ref2s = _reference_focal_loss(logits2, targets2, gamma=2.0,
                                  reduction="sum")
    assert jnp.allclose(loss2s, ref2s, atol=1e-4, rtol=1e-5), (loss2s, ref2s)

    loss2n = focal_loss(logits2, targets2, gamma=2.0, reduction="none",
                        tile_n=128)
    jax.block_until_ready(loss2n)
    ref2n = _reference_focal_loss(logits2, targets2, gamma=2.0,
                                  reduction="none")
    assert jnp.allclose(loss2n, ref2n, atol=1e-5, rtol=1e-5)

    print("KERNEL_OK")
</pallas_src>

<mosaic_0001>
module attributes {stable_mosaic.version = 11 : i64} {
  func.func @_focal_partial_kernel(%arg0: i32, %arg1: memref<8x4xf32, #tpu.memory_space<vmem>>, %arg2: memref<8x1xi32, #tpu.memory_space<vmem>>, %arg3: memref<1x8x128xf32, #tpu.memory_space<vmem>>) attributes {dimension_semantics = [#tpu.dimension_semantics<parallel>], iteration_bounds = array<i64: 1>, scalar_prefetch = 0 : i64, scratch_operands = 0 : i64, tpu.core_type = #tpu.core_type<tc>, window_params = [{transform_indices = @transform_0, window_bounds = array<i64: 8, 4>}, {transform_indices = @transform_1, window_bounds = array<i64: 8, 1>}, {transform_indices = @transform_2, window_bounds = array<i64: 1, 8, 128>}]} {
    %c0 = arith.constant 0 : index
    %c0_0 = arith.constant 0 : index
    %0 = vector.load %arg1[%c0, %c0_0] : memref<8x4xf32, #tpu.memory_space<vmem>>, vector<8x4xf32>
    %c0_1 = arith.constant 0 : index
    %c0_2 = arith.constant 0 : index
    %1 = vector.load %arg2[%c0_1, %c0_2] : memref<8x1xi32, #tpu.memory_space<vmem>>, vector<8x1xi32>
    %cst = arith.constant dense<0xFF800000> : vector<8xf32>
    %2 = vector.multi_reduction <maximumf>, %0, %cst [1] : vector<8x4xf32> to vector<8xf32>
    %3 = vector.shape_cast %2 : vector<8xf32> to vector<8x1xf32>
    %4 = vector.broadcast %3 : vector<8x1xf32> to vector<8x4xf32>
    %5 = arith.subf %0, %4 : vector<8x4xf32>
    %6 = math.exp %5 : vector<8x4xf32>
    %cst_3 = arith.constant dense<0.000000e+00> : vector<8xf32>
    %7 = vector.multi_reduction <add>, %6, %cst_3 [1] : vector<8x4xf32> to vector<8xf32>
    %8 = vector.shape_cast %7 : vector<8xf32> to vector<8x1xf32>
    %9 = tpu.iota {dimensions = array<i32: 1>} : vector<1x4xi32>
    %10 = vector.broadcast %9 : vector<1x4xi32> to vector<8x4xi32>
    %11 = vector.broadcast %1 : vector<8x1xi32> to vector<8x4xi32>
    %12 = arith.cmpi eq, %10, %11 : vector<8x4xi32>
    %cst_4 = arith.constant 0.000000e+00 : f32
    %13 = vector.broadcast %cst_4 : f32 to vector<8x4xf32>
    %14 = arith.select %12, %5, %13 : vector<8x4xi1>, vector<8x4xf32>
    %cst_5 = arith.constant dense<0.000000e+00> : vector<8xf32>
    %15 = vector.multi_reduction <add>, %14, %cst_5 [1] : vector<8x4xf32> to vector<8xf32>
    %16 = vector.shape_cast %15 : vector<8xf32> to vector<8x1xf32>
    %17 = math.log %8 : vector<8x1xf32>
    %18 = arith.subf %17, %16 : vector<8x1xf32>
    %cst_6 = arith.constant 0.000000e+00 : f32
    %19 = vector.broadcast %cst_6 : f32 to vector<8x1xf32>
    %20 = arith.subf %19, %18 : vector<8x1xf32>
    %21 = math.exp %20 : vector<8x1xf32>
    %cst_7 = arith.constant 1.000000e+00 : f32
    %22 = vector.broadcast %cst_7 : f32 to vector<8x1xf32>
    %23 = arith.subf %22, %21 : vector<8x1xf32>
    %cst_8 = arith.constant 0.000000e+00 : f32
    %24 = vector.broadcast %cst_8 : f32 to vector<8x1xf32>
    %25 = arith.maximumf %23, %24 : vector<8x1xf32>
    %26 = arith.mulf %25, %25 : vector<8x1xf32>
    %27 = arith.mulf %26, %18 : vector<8x1xf32>
    %c8_i32 = arith.constant 8 : i32
    %28 = arith.muli %arg0, %c8_i32 : i32
    %29 = tpu.iota {dimensions = array<i32: 0>} : vector<8x1xi32>
    %30 = vector.broadcast %28 : i32 to vector<8x1xi32>
    %31 = arith.addi %30, %29 : vector<8x1xi32>
    %c8_i32_9 = arith.constant 8 : i32
    %32 = vector.broadcast %c8_i32_9 : i32 to vector<8x1xi32>
    %33 = arith.cmpi slt, %31, %32 : vector<8x1xi32>
    %cst_10 = arith.constant 0.000000e+00 : f32
    %34 = vector.broadcast %cst_10 : f32 to vector<8x1xf32>
    %35 = arith.select %33, %27, %34 : vector<8x1xi1>, vector<8x1xf32>
    %36 = vector.shape_cast %35 : vector<8x1xf32> to vector<1x8x1xf32>
    %cst_11 = arith.constant dense<0.000000e+00> : vector<1xf32>
    %37 = vector.multi_reduction <add>, %36, %cst_11 [1, 2] : vector<1x8x1xf32> to vector<1xf32>
    %38 = vector.shape_cast %37 : vector<1xf32> to vector<1x1x1xf32>
    %39 = vector.extract %38[0, 0, 0] : f32 from vector<1x1x1xf32>
    %cst_12 = arith.constant 0.000000e+00 : f32
    %40 = vector.broadcast %cst_12 : f32 to vector<1x8x128xf32>
    %41 = vector.broadcast %39 : f32 to vector<1x8x128xf32>
    %42 = arith.addf %40, %41 : vector<1x8x128xf32>
    %c0_13 = arith.constant 0 : index
    %c0_14 = arith.constant 0 : index
    %c0_15 = arith.constant 0 : index
    %43 = vector.load %arg3[%c0_13, %c0_14, %c0_15] : memref<1x8x128xf32, #tpu.memory_space<vmem>>, vector<1x8x128xf32>
    tpu.vector_store %arg3[%c0_13, %c0_14, %c0_15], %42 {strides = array<i32>} : memref<1x8x128xf32, #tpu.memory_space<vmem>>, vector<1x8x128xf32>,
    return
  }
  func.func @transform_0(%arg0: i32) -> (i32, i32) {
    %c0_i32 = arith.constant 0 : i32
    %c0_i32_0 = arith.constant 0 : i32
    return %arg0, %c0_i32 : i32, i32
  }
  func.func @transform_1(%arg0: i32) -> (i32, i32) {
    %c0_i32 = arith.constant 0 : i32
    %c0_i32_0 = arith.constant 0 : i32
    return %arg0, %c0_i32 : i32, i32
  }
  func.func @transform_2(%arg0: i32) -> (i32, i32, i32) {
    %c0_i32 = arith.constant 0 : i32
    %c0_i32_0 = arith.constant 0 : i32
    %c0_i32_1 = arith.constant 0 : i32
    return %arg0, %c0_i32, %c0_i32_0 : i32, i32, i32
  }
}

</mosaic_0001>

<llo_original>
// kernel: tpu_custom_call.1
$region0: #{tpu_custom_call.1}
  #allocation0 [shape = 'u32[]', space=smem, size = 0x4, offset = 0x4, fixed_abs, tag = 'smem constant byte address 0x4 - core index']
  #allocation1 [shape = 'u32[144,128]{1,0:T(1,128)}', space=vmem, size = 0x12000, scoped, tag = 'internal scratch']
  %s0 = inlined_call_operand.vmem [shape: f32[8,4], index: 0, kind: input, shape index: {}]
  %s1 = inlined_call_operand.vmem [shape: s32[8,1], index: 1, kind: input, shape index: {}]
  %s2 = inlined_call_operand.hbm [shape: f32[1,8,128], index: 2, kind: output, shape index: {}]
  %s3 = sld [smem:[#allocation0]]
  $region18: #{tpu_custom_call.1} parent=0
    _
  %s5 = ssub.s32 1, %s3
  %s6 = scalar_select 0, %s5, %s3
  $region1: #{tpu_custom_call.1} parent=0
    #allocation2 [shape = 'u8[4096]{0}', space=vmem, size = 0x1000, scoped, tag = 'output window, operand 0, single buffered']
    #allocation3 [shape = 's32[1]{0}', space=sflag, size = 0x4, scoped, tag = 'scoped memory for tpu_custom_call.1']
    %7 = vsyncpa [#allocation3], 0
    // Predicated region
    $region2: #{tpu_custom_call.1} parent=1 // pred_check
      _
    $region3: #{tpu_custom_call.1} parent=1 // pred_check_branch
      %9 = sbr.rel (0) target = $region5
    $region4: #{tpu_custom_call.1} parent=1 // pred_region
      _
    $region5: #{tpu_custom_call.1} parent=1 // pred_fallthru
      _
    // Predicated region
    $region6: #{tpu_custom_call.1} parent=1 // pred_check
      _
    $region7: #{tpu_custom_call.1} parent=1 // pred_check_branch
      %11 = sbr.rel (0) target = $region9
    $region8: #{tpu_custom_call.1} parent=1 // pred_region
      _
    $region9: #{tpu_custom_call.1} parent=1 // pred_fallthru
      _
    %v12 = vld [vmem:[%s0] sm:$0xff]
    %v13 = vld [vmem:[%s1] sm:$0xff]
    %vm14 = vcmask 31744
    %v15 = vsel %vm14, %v12, -inf
    %16 = vmax.xlane.f32.xlu0 %v15
    %v17 = vpop.xlane.xlu0 %16
    %v18 = vsub.f32 %v12, %v17
    %v19 = vmul.f32 %v18, 1.442695
    %v20 = vpow.pop %v19
    %v21 = vsel %vm14, %v20, 0.0
    %22 = vadd.xlane.f32.xlu0 %v21
    %v23 = vpop.xlane.xlu0 %22
    %v24 = vlaneseq
    %v25 = vand.u32 %v24, 127
    %26 = vset.pattern.permute.xlu0 0
    %27 = vperm.xlu0 %26, %v13
    %v28 = vpop.permute.xlu0 %27
    %vm29 = vcmp.eq.s32.totalorder %v25, %v28
    %v30 = vsel %vm29, %v18, 0.0
    %v31 = vsel %vm14, %v30, 0.0
    %32 = vadd.xlane.f32.xlu0 %v31
    %v33 = vpop.xlane.xlu0 %32
    %v34 = vlog2.pop %v23
    %v35 = vmul.f32 %v34, 0.6931472
    %v36 = vsub.f32 %v35, %v33
    %v37 = vsub.f32 0.0, %v36
    %v38 = vmul.f32 %v37, 1.442695
    %v39 = vpow.pop %v38
    %v40 = vsub.f32 1.0, %v39
    %v41 = vmax.f32 %v40, 0.0
    %v42 = vmul.f32 %v41, %v41
    %v43 = vmul.f32 %v42, %v36
    %s44 = smul.u32 0, 8
    %v45 = vlaneseq
    %v46 = vshrl.u32 %v45, 7
    %v47 = vstv %s44
    %v48 = vadd.s32 %v47, %v46
    %vm49 = vcmp.lt.s32.totalorder %v48, 8
    %v50 = vsel %vm49, %v43, 0.0
    %vm51 = vcmask 7168
    %v52 = vsel %vm51, %v50, 0.0
    %53 = vadd.xlane.f32.xlu0 %v52
    %v54 = vpop.xlane.xlu0 %53
    %v55 = vrot.slane %v54, 4
    %v56 = vadd.f32 %v54, %v55
    %v57 = vrot.slane %v56, 2
    %v58 = vadd.f32 %v56, %v57
    %v59 = vrot.slane %v58, 1
    %v60 = vadd.f32 %v58, %v59
    %s61 = vtos %v60
    %v62 = vstv %s61
    %v63 = vadd.f32 %v62, 0.0
    %64 = vst [vmem:[#allocation2] sm:$0xff] %v63
    // Predicated region
    $region10: #{tpu_custom_call.1} parent=1 // pred_check
      _
    $region11: #{tpu_custom_call.1} parent=1 // pred_check_branch
      %66 = sbr.rel (0) target = $region13
    $region12: #{tpu_custom_call.1} parent=1 // pred_region
      %s68 = ssub.s32 128, 128
      %69 = vsyncadd [#allocation3], %s68
      %s71 = sshll.u32 [#allocation2], 4
      %s72 = int_to_ptr.vmem [resolvable:$true] %s71
      %74 = dma.vmem_to_hbm [thread:$0]  %s72, 128, %s2, [#allocation3]
    $region13: #{tpu_custom_call.1} parent=1 // pred_fallthru
      _
    // Predicated region
    $region14: #{tpu_custom_call.1} parent=1 // pred_check
      _
    $region15: #{tpu_custom_call.1} parent=1 // pred_check_branch
      %76 = sbr.rel (0) target = $region17
    $region16: #{tpu_custom_call.1} parent=1 // pred_region
      %77 = dma.done [#allocation3], 128
    $region17: #{tpu_custom_call.1} parent=1 // pred_fallthru
      _
    %78 = vsyncpa [#allocation3], 1

</llo_original>
